<compile_context>
chip_gen: v5e
topology: v5e:2x2
jax: 0.10.0
libtpu: 0.0.40
codegen_flags: <defaults>
</compile_context>

<pallas_src>
import functools

import jax
import jax.numpy as jnp
from jax.experimental import pallas as pl
from jax.experimental.pallas import tpu as pltpu


def _pick_row_tile(n, pref=512):
    """Largest multiple-of-8 divisor of n that is <= min(pref, n // 2).

    Keeping at least two row blocks lets the 'parallel' grid axis feed both
    TensorCores on v7x.  Falls back to a single full block for tiny/odd n.
    """
    hi = min(pref, n // 2)
    for t in range(hi - hi % 8, 7, -8):
        if n % t == 0:
            return t
    return n


def _pick_col_tile(n, pref=512):
    """Largest multiple-of-128 (lane) divisor of n <= pref, else full n."""
    hi = min(pref, n)
    for t in range(hi - hi % 128, 127, -128):
        if n % t == 0:
            return t
    return n


def _pick_feat_tile(d, pref=2048):
    """Feature (reduction) tile: multiple-of-128 divisor of d, else full d."""
    if d <= pref:
        return d
    for t in range(pref - pref % 128, 127, -128):
        if d % t == 0:
            return t
    return d


def _contrastive_kernel(imgs_ref, capst_ref, mdrow_ref, mdcol_ref,
                        out_ref, scores_acc):
    j = pl.program_id(1)          # column block ("arbitrary"; out resident)
    k = pl.program_id(2)          # feature block ("arbitrary"; scores resident)
    nk = pl.num_programs(2)

    @pl.when((j == 0) & (k == 0))
    def _init_out():
        out_ref[...] = jnp.zeros_like(out_ref)

    @pl.when(k == 0)
    def _init_scores():
        scores_acc[...] = jnp.zeros_like(scores_acc)

    # MXU: bf16 x bf16 -> f32 accumulation.  caps was pre-transposed in the
    # wrapper, so this is a plain NN matmul (no per-tile transpose).
    scores_acc[...] += jnp.dot(imgs_ref[...], capst_ref[...],
                               preferred_element_type=jnp.float32)

    @pl.when(k == nk - 1)
    def _epilogue():
        scores = scores_acc[...]                   # (tm, tn) f32
        d_row = mdrow_ref[pl.ds(j, 1), :]          # (1, tn): margin - diag[col]
        d_col = mdcol_ref[...]                     # (tm, 1): margin - diag[row]
        cost = (jnp.maximum(d_row + scores, 0.0) +
                jnp.maximum(d_col + scores, 0.0))
        # Sublane-only reduce -> lane-dense (1, tn) partial, accumulated in the
        # resident output block; final cross-lane reduce happens in the wrapper.
        out_ref[...] += jnp.sum(cost, axis=0, keepdims=True)[None]


def contrastive_loss(imgs, caps, margin=0.2, *, compute_dtype=jnp.bfloat16,
                     row_tile=None, col_tile=None, feat_tile=None):
    """imgs: (N, D), caps: (N, D) -> scalar f32 hinge contrastive loss."""
    assert imgs.ndim == 2 and imgs.shape == caps.shape
    n, d = imgs.shape
    margin = float(margin)

    # bf16 operands for the MXU (also halves the operand DMA bytes).
    imgs_c = jnp.asarray(imgs).astype(compute_dtype)
    caps_c = jnp.asarray(caps).astype(compute_dtype)

    # diag[i] = <imgs[i], caps[i]>, computed from the SAME cast operands so the
    # algebraic diagonal correction below matches the kernel's MXU scores up to
    # f32 accumulation-order ulps.
    diag = jnp.sum(imgs_c.astype(jnp.float32) * caps_c.astype(jnp.float32),
                   axis=1)
    mdiag = jnp.float32(margin) - diag                       # (n,)

    tm = row_tile if row_tile is not None else _pick_row_tile(n)
    tn = col_tile if col_tile is not None else _pick_col_tile(n)
    dk = feat_tile if feat_tile is not None else _pick_feat_tile(d)
    assert n % tm == 0 and n % tn == 0 and d % dk == 0
    num_i, num_j, num_k = n // tm, n // tn, d // dk

    caps_t = caps_c.T                          # (d, n): one XLA transpose pass
    mdiag_row = mdiag.reshape(num_j, tn)       # VMEM-resident (constant index)
    mdiag_col = mdiag.reshape(n, 1)            # (tm, 1) blocks, fetched per i

    partials = pl.pallas_call(
        _contrastive_kernel,
        out_shape=jax.ShapeDtypeStruct((num_i, 1, tn), jnp.float32),
        grid_spec=pltpu.PrefetchScalarGridSpec(
            num_scalar_prefetch=0,
            grid=(num_i, num_j, num_k),
            in_specs=[
                pl.BlockSpec((tm, dk), lambda i, j, k: (i, k)),     # imgs
                pl.BlockSpec((dk, tn), lambda i, j, k: (k, j)),     # caps.T
                pl.BlockSpec((num_j, tn), lambda i, j, k: (0, 0)),  # margin-diag (cols), resident
                pl.BlockSpec((tm, 1), lambda i, j, k: (i, 0)),      # margin-diag (rows)
            ],
            out_specs=pl.BlockSpec((1, 1, tn), lambda i, j, k: (i, 0, 0)),
            scratch_shapes=[pltpu.VMEM((tm, tn), jnp.float32)],
        ),
        compiler_params=pltpu.CompilerParams(
            dimension_semantics=("parallel", "arbitrary", "arbitrary"),
            vmem_limit_bytes=48 * 1024 * 1024,
        ),
    )(imgs_c, caps_t, mdiag_row, mdiag_col)

    # Each unmasked cost matrix has exactly max(margin, 0) on its n diagonal
    # entries (margin - diag[i] + scores[i, i] == margin), so subtract them
    # here instead of masking N x N tiles inside the kernel.
    return jnp.sum(partials) - 2.0 * n * max(margin, 0.0)


def _reference(imgs, caps, margin=0.2):
    """Pure-JAX port of the PyTorch forward (f32, HIGHEST precision matmul)."""
    scores = jnp.dot(imgs, caps.T, precision=jax.lax.Precision.HIGHEST)
    diag = jnp.diag(scores)
    cost_s = jnp.maximum((margin - diag)[None, :] + scores, 0.0)
    cost_im = jnp.maximum((margin - diag)[:, None] + scores, 0.0)
    cost_s = cost_s - jnp.diag(jnp.diag(cost_s))
    cost_im = cost_im - jnp.diag(jnp.diag(cost_im))
    return cost_s.sum() + cost_im.sum()


if __name__ == "__main__":
    key = jax.random.PRNGKey(0)
    k1, k2, k3, k4 = jax.random.split(key, 4)

    # Primary small case: batch of 8 image/caption embedding pairs, hidden=32.
    N, D = 8, 32
    imgs = jax.random.normal(k1, (N, D), dtype=jnp.float32)
    caps = jax.random.normal(k2, (N, D), dtype=jnp.float32)

    loss = contrastive_loss(imgs, caps, margin=0.2)
    jax.block_until_ready(loss)

    # Tight check vs a reference using the same bf16-cast inputs (kernel math),
    # loose check vs the pure-f32 PyTorch-semantics reference (bf16 rounding).
    ref_bf16 = _reference(imgs.astype(jnp.bfloat16).astype(jnp.float32),
                          caps.astype(jnp.bfloat16).astype(jnp.float32), 0.2)
    ref_f32 = _reference(imgs, caps, 0.2)
    assert jnp.allclose(loss, ref_bf16, rtol=5e-3, atol=1e-2), (loss, ref_bf16)
    assert jnp.allclose(loss, ref_f32, rtol=3e-2, atol=1.0), (loss, ref_f32)

    # Secondary modest case exercising the multi-block (i, j, k) tiling paths.
    N2, D2 = 256, 384
    imgs2 = jax.random.normal(k3, (N2, D2), dtype=jnp.float32)
    caps2 = jax.random.normal(k4, (N2, D2), dtype=jnp.float32)
    loss2 = contrastive_loss(imgs2, caps2, margin=0.2,
                             row_tile=64, col_tile=128, feat_tile=128)
    jax.block_until_ready(loss2)
    ref2_bf16 = _reference(imgs2.astype(jnp.bfloat16).astype(jnp.float32),
                           caps2.astype(jnp.bfloat16).astype(jnp.float32), 0.2)
    ref2_f32 = _reference(imgs2, caps2, 0.2)
    assert jnp.allclose(loss2, ref2_bf16, rtol=5e-3, atol=1e-2), (loss2, ref2_bf16)
    assert jnp.allclose(loss2, ref2_f32, rtol=3e-2, atol=1.0), (loss2, ref2_f32)

    print("KERNEL_OK")
</pallas_src>

<mosaic_0001>
module attributes {stable_mosaic.version = 11 : i64} {
  func.func @_contrastive_kernel(%arg0: i32, %arg1: i32, %arg2: i32, %arg3: memref<8x32xbf16, #tpu.memory_space<vmem>>, %arg4: memref<32x8xbf16, #tpu.memory_space<vmem>>, %arg5: memref<1x8xf32, #tpu.memory_space<vmem>>, %arg6: memref<8x1xf32, #tpu.memory_space<vmem>>, %arg7: memref<1x1x8xf32, #tpu.memory_space<vmem>>, %arg8: memref<8x8xf32, #tpu.memory_space<vmem>>) attributes {dimension_semantics = [#tpu.dimension_semantics<parallel>, #tpu.dimension_semantics<arbitrary>, #tpu.dimension_semantics<arbitrary>], iteration_bounds = array<i64: 1, 1, 1>, scalar_prefetch = 0 : i64, scratch_operands = 1 : i64, tpu.core_type = #tpu.core_type<tc>, window_params = [{transform_indices = @transform_0, window_bounds = array<i64: 8, 32>}, {transform_indices = @transform_1, window_bounds = array<i64: 32, 8>}, {pipeline_mode = #tpu.pipeline_mode<synchronous>, transform_indices = @transform_2, window_bounds = array<i64: 1, 8>}, {transform_indices = @transform_3, window_bounds = array<i64: 8, 1>}, {transform_indices = @transform_4, window_bounds = array<i64: 1, 1, 8>}]} {
    %c0_i32 = arith.constant 0 : i32
    %0 = arith.cmpi eq, %arg1, %c0_i32 : i32
    %c0_i32_0 = arith.constant 0 : i32
    %1 = arith.cmpi eq, %arg2, %c0_i32_0 : i32
    %2 = arith.andi %0, %1 : i1
    %3 = arith.extui %2 : i1 to i32
    %c0_i32_1 = arith.constant 0 : i32
    %4 = arith.cmpi ne, %3, %c0_i32_1 : i32
    scf.if %4 {
      %cst_13 = arith.constant 0.000000e+00 : f32
      %17 = vector.broadcast %cst_13 : f32 to vector<1x1x8xf32>
      %c0_14 = arith.constant 0 : index
      %c0_15 = arith.constant 0 : index
      %c0_16 = arith.constant 0 : index
      %18 = vector.load %arg7[%c0_14, %c0_15, %c0_16] : memref<1x1x8xf32, #tpu.memory_space<vmem>>, vector<1x1x8xf32>
      tpu.vector_store %arg7[%c0_14, %c0_15, %c0_16], %17 {strides = array<i32>} : memref<1x1x8xf32, #tpu.memory_space<vmem>>, vector<1x1x8xf32>,
    } else {
    }
    %c0_i32_2 = arith.constant 0 : i32
    %5 = arith.cmpi eq, %arg2, %c0_i32_2 : i32
    %6 = arith.extui %5 : i1 to i32
    %c0_i32_3 = arith.constant 0 : i32
    %7 = arith.cmpi ne, %6, %c0_i32_3 : i32
    scf.if %7 {
      %cst_13 = arith.constant 0.000000e+00 : f32
      %17 = vector.broadcast %cst_13 : f32 to vector<8x8xf32>
      %c0_14 = arith.constant 0 : index
      %c0_15 = arith.constant 0 : index
      %18 = vector.load %arg8[%c0_14, %c0_15] : memref<8x8xf32, #tpu.memory_space<vmem>>, vector<8x8xf32>
      tpu.vector_store %arg8[%c0_14, %c0_15], %17 {strides = array<i32>} : memref<8x8xf32, #tpu.memory_space<vmem>>, vector<8x8xf32>,
    } else {
    }
    %c0 = arith.constant 0 : index
    %c0_4 = arith.constant 0 : index
    %8 = vector.load %arg8[%c0, %c0_4] : memref<8x8xf32, #tpu.memory_space<vmem>>, vector<8x8xf32>
    %c0_5 = arith.constant 0 : index
    %c0_6 = arith.constant 0 : index
    %9 = vector.load %arg3[%c0_5, %c0_6] : memref<8x32xbf16, #tpu.memory_space<vmem>>, vector<8x32xbf16>
    %c0_7 = arith.constant 0 : index
    %c0_8 = arith.constant 0 : index
    %10 = vector.load %arg4[%c0_7, %c0_8] : memref<32x8xbf16, #tpu.memory_space<vmem>>, vector<32x8xbf16>
    %cst = arith.constant dense<0.000000e+00> : vector<8x8xf32>
    %11 = tpu.matmul %9, %10, %cst {dimension_numbers = #tpu.dot_dimension_numbers<[1], [0], [0], [1], [0, 0, 1, 1], [], []>} : vector<8x32xbf16>, vector<32x8xbf16>, vector<8x8xf32> -> vector<8x8xf32>
    %12 = arith.addf %8, %11 : vector<8x8xf32>
    %c0_9 = arith.constant 0 : index
    %c0_10 = arith.constant 0 : index
    %13 = vector.load %arg8[%c0_9, %c0_10] : memref<8x8xf32, #tpu.memory_space<vmem>>, vector<8x8xf32>
    tpu.vector_store %arg8[%c0_9, %c0_10], %12 {strides = array<i32>} : memref<8x8xf32, #tpu.memory_space<vmem>>, vector<8x8xf32>,
    %c0_i32_11 = arith.constant 0 : i32
    %14 = arith.cmpi eq, %arg2, %c0_i32_11 : i32
    %15 = arith.extui %14 : i1 to i32
    %c0_i32_12 = arith.constant 0 : i32
    %16 = arith.cmpi ne, %15, %c0_i32_12 : i32
    scf.if %16 {
      %c0_13 = arith.constant 0 : index
      %c0_14 = arith.constant 0 : index
      %17 = vector.load %arg8[%c0_13, %c0_14] : memref<8x8xf32, #tpu.memory_space<vmem>>, vector<8x8xf32>
      %18 = arith.index_cast %arg1 : i32 to index
      %c0_15 = arith.constant 0 : index
      %19 = vector.load %arg5[%18, %c0_15] : memref<1x8xf32, #tpu.memory_space<vmem>>, vector<1x8xf32>
      %c0_16 = arith.constant 0 : index
      %c0_17 = arith.constant 0 : index
      %20 = vector.load %arg6[%c0_16, %c0_17] : memref<8x1xf32, #tpu.memory_space<vmem>>, vector<8x1xf32>
      %21 = vector.broadcast %19 : vector<1x8xf32> to vector<8x8xf32>
      %22 = arith.addf %21, %17 : vector<8x8xf32>
      %cst_18 = arith.constant 0.000000e+00 : f32
      %23 = vector.broadcast %cst_18 : f32 to vector<8x8xf32>
      %24 = arith.maximumf %22, %23 : vector<8x8xf32>
      %25 = vector.broadcast %20 : vector<8x1xf32> to vector<8x8xf32>
      %26 = arith.addf %25, %17 : vector<8x8xf32>
      %cst_19 = arith.constant 0.000000e+00 : f32
      %27 = vector.broadcast %cst_19 : f32 to vector<8x8xf32>
      %28 = arith.maximumf %26, %27 : vector<8x8xf32>
      %29 = arith.addf %24, %28 : vector<8x8xf32>
      %c0_20 = arith.constant 0 : index
      %c0_21 = arith.constant 0 : index
      %c0_22 = arith.constant 0 : index
      %30 = vector.load %arg7[%c0_20, %c0_21, %c0_22] : memref<1x1x8xf32, #tpu.memory_space<vmem>>, vector<1x1x8xf32>
      %cst_23 = arith.constant dense<0.000000e+00> : vector<8xf32>
      %31 = vector.multi_reduction <add>, %29, %cst_23 [0] : vector<8x8xf32> to vector<8xf32>
      %32 = vector.shape_cast %31 : vector<8xf32> to vector<1x8xf32>
      %33 = vector.shape_cast %32 : vector<1x8xf32> to vector<1x1x8xf32>
      %34 = arith.addf %30, %33 : vector<1x1x8xf32>
      %c0_24 = arith.constant 0 : index
      %c0_25 = arith.constant 0 : index
      %c0_26 = arith.constant 0 : index
      %35 = vector.load %arg7[%c0_24, %c0_25, %c0_26] : memref<1x1x8xf32, #tpu.memory_space<vmem>>, vector<1x1x8xf32>
      tpu.vector_store %arg7[%c0_24, %c0_25, %c0_26], %34 {strides = array<i32>} : memref<1x1x8xf32, #tpu.memory_space<vmem>>, vector<1x1x8xf32>,
    } else {
    }
    return
  }
  func.func @transform_0(%arg0: i32, %arg1: i32, %arg2: i32) -> (i32, i32) {
    %c0_i32 = arith.constant 0 : i32
    return %arg0, %arg2 : i32, i32
  }
  func.func @transform_1(%arg0: i32, %arg1: i32, %arg2: i32) -> (i32, i32) {
    %c0_i32 = arith.constant 0 : i32
    return %arg2, %arg1 : i32, i32
  }
  func.func @transform_2(%arg0: i32, %arg1: i32, %arg2: i32) -> (i32, i32) {
    %c0_i32 = arith.constant 0 : i32
    %c0_i32_0 = arith.constant 0 : i32
    %c0_i32_1 = arith.constant 0 : i32
    return %c0_i32, %c0_i32_0 : i32, i32
  }
  func.func @transform_3(%arg0: i32, %arg1: i32, %arg2: i32) -> (i32, i32) {
    %c0_i32 = arith.constant 0 : i32
    %c0_i32_0 = arith.constant 0 : i32
    return %arg0, %c0_i32 : i32, i32
  }
  func.func @transform_4(%arg0: i32, %arg1: i32, %arg2: i32) -> (i32, i32, i32) {
    %c0_i32 = arith.constant 0 : i32
    %c0_i32_0 = arith.constant 0 : i32
    %c0_i32_1 = arith.constant 0 : i32
    return %arg0, %c0_i32, %c0_i32_0 : i32, i32, i32
  }
}

</mosaic_0001>

<llo_original>
// kernel: tpu_custom_call.1
$region0: #{tpu_custom_call.1}
  #allocation0 [shape = 'u32[]', space=smem, size = 0x4, offset = 0x4, fixed_abs, tag = 'smem constant byte address 0x4 - core index']
  #allocation1 [shape = 'u32[72,128]{1,0:T(1,128)}', space=vmem, size = 0x9000, scoped, tag = 'internal scratch']
  #allocation2 [shape = 'f32[8,8]{1,0:T(8,128)}', space=vmem, size = 0x1000, scoped, tag = 'scratch operand']
  %s0 = inlined_call_operand.vmem [shape: bf16[8,32], index: 0, kind: input, shape index: {}]
  %s1 = inlined_call_operand.vmem [shape: bf16[32,8], index: 1, kind: input, shape index: {}]
  %s2 = inlined_call_operand.vmem [shape: f32[1,8], index: 2, kind: input, shape index: {}]
  %s3 = inlined_call_operand.vmem [shape: f32[8,1], index: 3, kind: input, shape index: {}]
  %s4 = inlined_call_operand.hbm [shape: f32[1,1,8], index: 4, kind: output, shape index: {}]
  %s5 = sld [smem:[#allocation0]]
  $region38: #{tpu_custom_call.1} parent=0
    _
  %s7 = ssub.s32 1, %s5
  %s8 = scalar_select 0, %s7, %s5
  $region1: #{tpu_custom_call.1} parent=0
    #allocation3 [shape = 'u8[512]{0}', space=vmem, size = 0x400, scoped, tag = 'output window, operand 0, single buffered']
    #allocation4 [shape = 's32[1]{0}', space=sflag, size = 0x4, scoped, tag = 'scoped memory for tpu_custom_call.1']
    %9 = vsyncpa [#allocation4], 0
    // Predicated region
    $region2: #{tpu_custom_call.1} parent=1 // pred_check
      _
    $region3: #{tpu_custom_call.1} parent=1 // pred_check_branch
      %11 = sbr.rel (0) target = $region5
    $region4: #{tpu_custom_call.1} parent=1 // pred_region
      _
    $region5: #{tpu_custom_call.1} parent=1 // pred_fallthru
      _
    // Predicated region
    $region6: #{tpu_custom_call.1} parent=1 // pred_check
      _
    $region7: #{tpu_custom_call.1} parent=1 // pred_check_branch
      %13 = sbr.rel (0) target = $region9
    $region8: #{tpu_custom_call.1} parent=1 // pred_region
      _
    $region9: #{tpu_custom_call.1} parent=1 // pred_fallthru
      _
    // Predicated region
    $region10: #{tpu_custom_call.1} parent=1 // pred_check
      _
    $region11: #{tpu_custom_call.1} parent=1 // pred_check_branch
      %15 = sbr.rel (0) target = $region13
    $region12: #{tpu_custom_call.1} parent=1 // pred_region
      _
    $region13: #{tpu_custom_call.1} parent=1 // pred_fallthru
      _
    // Predicated region
    $region14: #{tpu_custom_call.1} parent=1 // pred_check
      _
    $region15: #{tpu_custom_call.1} parent=1 // pred_check_branch
      %17 = sbr.rel (0) target = $region17
    $region16: #{tpu_custom_call.1} parent=1 // pred_region
      _
    $region17: #{tpu_custom_call.1} parent=1 // pred_fallthru
      _
    %p19 = scmp.eq.s32.totalorder 0, 0
    %p20 = scmp.eq.s32.totalorder 0, 0
    %p21 = pnand %p19, %p20
    %p22 = pneg %p21
    // Predicated region
    $region18: #{tpu_custom_call.1} parent=1 // pred_check
      _
    $region19: #{tpu_custom_call.1} parent=1 // pred_check_branch
      %24 = sbr.rel (%p21) target = $region21
    $region20: #{tpu_custom_call.1} parent=1 // pred_region
      %vm25 = vcmask 57344
      %26 = vst.msk [vmem:[#allocation3] sm:$0x1] %vm25, 0.0
    $region21: #{tpu_custom_call.1} parent=1 // pred_fallthru
      _
    // Predicated region
    $region22: #{tpu_custom_call.1} parent=1 // pred_check
      %p27 = pneg %p20
    $region23: #{tpu_custom_call.1} parent=1 // pred_check_branch
      %29 = sbr.rel (%p27) target = $region25
    $region24: #{tpu_custom_call.1} parent=1 // pred_region
      %vm30 = vcmask 64512
      %31 = vst.msk [vmem:[#allocation2] sm:$0xff] %vm30, 0.0
    $region25: #{tpu_custom_call.1} parent=1 // pred_fallthru
      _
    %v32 = vld [vmem:[#allocation2] sm:$0xff]
    %v33 = vld [vmem:[%s0] sm:$0xf]
    %v34 = vld [vmem:[%s1] sm:$0xf]
    %v35 = vld [vmem:[%s1 + $0x4] sm:$0xf]
    %v36 = vld [vmem:[%s1 + $0x8] sm:$0xf]
    %v37 = vld [vmem:[%s1 + $0xc] sm:$0xf]
    %v42 = vunpack.c.l.b16 %v34
    %v43 = vunpack.c.l.b16 %v35
    %v44 = vunpack.c.l.b16 %v36
    %v45 = vunpack.c.l.b16 %v37
    %v46 = vpack.c.b16 %v43, %v42
    %v47 = vpack.c.b16 %v45, %v44
    %vm50 = vcmask 261120
    %v52 = vsel %vm50, %v33, 0
    %54 = vmatpush.bf16.msra.mxu0 0
    %55 = vmatpush.bf16.msra.mxu0 0
    %56 = vmatpush.bf16.msra.mxu0 0
    %57 = vmatpush.bf16.msra.mxu0 0
    %58 = vmatpush.bf16.msra.mxu0 0
    %59 = vmatpush.bf16.msra.mxu0 0
    %60 = vmatpush.bf16.msra.mxu0 %v47
    %61 = vmatpush.bf16.msra.mxu0 %v46
    %62 = vmatmul.bf16.gmra.mxu0 %v52
    %v63 = vpop.f32.mrf.mxu0
    %v64 = vadd.f32 0.0, %v63
    %v65 = vpop.f32.mrf.mxu0
    %66 = vdwg.mxu0
    %v67 = vadd.f32 %v32, %v64
    %vm68 = vcmask 64512
    %69 = vst.msk [vmem:[#allocation2] sm:$0xff] %vm68, %v67
    // Predicated region
    $region26: #{tpu_custom_call.1} parent=1 // pred_check
      %p70 = pneg %p20
    $region27: #{tpu_custom_call.1} parent=1 // pred_check_branch
      %72 = sbr.rel (%p70) target = $region29
    $region28: #{tpu_custom_call.1} parent=1 // pred_region
      %v73 = vld [vmem:[#allocation2] sm:$0xff]
      %v74 = vld [vmem:[%s2] sm:$0x1]
      %v75 = vld [vmem:[%s3] sm:$0xff]
      %v77 = vperm.slane %v74, 0
      %v79 = vadd.f32 %v77, %v73
      %v80 = vmax.f32 %v79, 0.0
      %82 = vset.pattern.permute.xlu0 0
      %83 = vperm.xlu0 %82, %v75
      %v84 = vpop.permute.xlu0 %83
      %v86 = vadd.f32 %v84, %v73
      %v87 = vmax.f32 %v86, 0.0
      %v88 = vadd.f32 %v80, %v87
      %v89 = vld [vmem:[#allocation3] sm:$0x1]
      %v90 = vsel %vm68, %v88, 0.0
      %v91 = vrot.slane %v90, 4
      %v92 = vadd.f32 %v90, %v91
      %v93 = vrot.slane %v92, 2
      %v94 = vadd.f32 %v92, %v93
      %v95 = vrot.slane %v94, 1
      %v96 = vadd.f32 %v94, %v95
      %v97 = vadd.f32 %v89, %v96
      %vm98 = vcmask 57344
      %99 = vst.msk [vmem:[#allocation3] sm:$0x1] %vm98, %v97
    $region29: #{tpu_custom_call.1} parent=1 // pred_fallthru
      _
    // Predicated region
    $region30: #{tpu_custom_call.1} parent=1 // pred_check
      _
    $region31: #{tpu_custom_call.1} parent=1 // pred_check_branch
      %101 = sbr.rel (0) target = $region33
    $region32: #{tpu_custom_call.1} parent=1 // pred_region
      %103 = vsyncadd [#allocation4], 0
      %s105 = sshll.u32 [#allocation3], 4
      %s106 = int_to_ptr.vmem [resolvable:$true] %s105
      %s107 = sshll.u32 %s4, 4
      %s108 = int_to_ptr.hbm [resolvable:$true] %s107
      %110 = dma.vmem_to_hbm [thread:$0]  %s106, 16, %s108, [#allocation4]
    $region33: #{tpu_custom_call.1} parent=1 // pred_fallthru
      _
    // Predicated region
    $region34: #{tpu_custom_call.1} parent=1 // pred_check
      _
    $region35: #{tpu_custom_call.1} parent=1 // pred_check_branch
      %112 = sbr.rel (0) target = $region37
    $region36: #{tpu_custom_call.1} parent=1 // pred_region
      %114 = dma.done [#allocation4], 16
    $region37: #{tpu_custom_call.1} parent=1 // pred_fallthru
      _
    %115 = vsyncpa [#allocation4], 1

</llo_original>
